<compile_context>
chip_gen: v7x
topology: tpu7x:2x2x1
jax: 0.10.0
libtpu: 0.0.40
codegen_flags: <defaults>
</compile_context>

<pallas_src>
import functools

import numpy as np
import jax
import jax.numpy as jnp
from jax.experimental import pallas as pl
from jax.experimental.pallas import tpu as pltpu


def _vq_kernel(z_ref, e_nd_ref, e_dn_ref, e2_ref, zq_ref, idx_ref, loss_ref):
    # z_ref    : (1, C, T)    NCHW input block (C = e_dim channels, T spatial tile)
    # e_nd_ref : (n_e, C)     codebook
    # e_dn_ref : (C, n_e)     codebook transposed (for the one-hot gather matmul)
    # e2_ref   : (n_e, 1)     per-code squared norms (precomputed in the wrapper)
    # zq_ref   : (1, C, T)    quantized output block (already NCHW layout)
    # idx_ref  : (1, 1, 1, T) int32 argmin indices for the T pixels of this tile
    # loss_ref : (1, 1, 1, T) f32 per-pixel sum_c (z_q - z)^2 partials
    z = z_ref[0].astype(jnp.float32)               # (C, T)
    e_nd = e_nd_ref[...].astype(jnp.float32)       # (n_e, C)
    e_dn = e_dn_ref[...].astype(jnp.float32)       # (C, n_e)
    e2 = e2_ref[...].astype(jnp.float32)           # (n_e, 1)

    n_e = e_nd.shape[0]

    # argmin_n ||z_p - e_n||^2 == argmin_n (||e_n||^2 - 2 e_n . z_p)
    # (the ||z_p||^2 term is constant per pixel and dropped).
    ze = jnp.dot(e_nd, z, preferred_element_type=jnp.float32)    # (n_e, T) on MXU
    d = e2 - 2.0 * ze                                            # (n_e, T)

    # first-minimum index along the codebook (sublane) axis, matching
    # torch.argmin tie-breaking.
    row = jax.lax.broadcasted_iota(jnp.int32, d.shape, 0)        # (n_e, T)
    d_min = jnp.min(d, axis=0, keepdims=True)                    # (1, T)
    idx = jnp.min(jnp.where(d == d_min, row, n_e),
                  axis=0, keepdims=True)                         # (1, T) int32

    # gather selected codebook rows with a one-hot matmul (MXU); the result is
    # (C, T), i.e. exactly the NCHW layout of the output block.
    onehot = (row == idx).astype(jnp.float32)                    # (n_e, T)
    zq = jnp.dot(e_dn, onehot, preferred_element_type=jnp.float32)  # (C, T)

    zq_ref[0] = zq.astype(zq_ref.dtype)
    idx_ref[0, 0] = idx

    diff = zq - z
    loss_ref[0, 0] = jnp.sum(diff * diff, axis=0, keepdims=True)  # (1, T)


def _pick_spatial_tile(hw, n_e, cap=2048):
    """Largest spatial tile (multiple of 128 for lane-dense blocks) dividing H*W
    while keeping the (n_e, T) f32 intermediates comfortably inside VMEM
    (re-derived per codebook size; relevant for v7x's 64 MiB VMEM)."""
    budget_elems = 2 * 1024 * 1024                  # ~8 MiB per (n_e, T) f32 buffer
    cap = min(cap, max(128, budget_elems // max(n_e, 1)))
    cap = max(128, (cap // 128) * 128)
    if hw <= cap:
        return hw
    t = cap
    while t >= 128:
        if hw % t == 0:
            return t
        t -= 128
    return hw   # fallback: one tile per batch element (always block-shape safe)


@functools.partial(jax.jit, static_argnames=("beta",))
def vector_quantizer2_forward(z_nchw, embedding, beta=0.25):
    """Forward pass of VectorQuantizer2 (legacy=True, remap=None,
    sane_index_shape=False).  Returns (z_q_nchw, loss, min_encoding_indices).

    # TODO(synk): forward only -- the straight-through / detach() commitment-loss
    # gradient semantics require a jax.custom_vjp to be used for training.
    """
    B, C, H, W = z_nchw.shape
    n_e, e_dim = embedding.shape
    assert C == e_dim
    HW = H * W
    t = _pick_spatial_tile(HW, n_e)
    assert HW % t == 0
    nj = HW // t

    z3 = z_nchw.reshape(B, C, HW)
    e_nd = embedding.astype(jnp.float32)               # (n_e, D)
    e_dn = e_nd.T                                      # (D, n_e) lane-dense codebook
    e2 = jnp.sum(e_nd * e_nd, axis=1, keepdims=True)   # (n_e, 1) hoisted out of kernel

    zq3, idx4, loss4 = pl.pallas_call(
        _vq_kernel,
        out_shape=(
            jax.ShapeDtypeStruct((B, C, HW), z_nchw.dtype),
            jax.ShapeDtypeStruct((B, nj, 1, t), jnp.int32),
            jax.ShapeDtypeStruct((B, nj, 1, t), jnp.float32),
        ),
        grid_spec=pltpu.PrefetchScalarGridSpec(
            num_scalar_prefetch=0,
            grid=(B, nj),
            in_specs=[
                pl.BlockSpec((1, C, t), lambda b, j: (b, 0, j)),
                pl.BlockSpec((n_e, e_dim), lambda b, j: (0, 0)),
                pl.BlockSpec((e_dim, n_e), lambda b, j: (0, 0)),
                pl.BlockSpec((n_e, 1), lambda b, j: (0, 0)),
            ],
            out_specs=[
                pl.BlockSpec((1, C, t), lambda b, j: (b, 0, j)),
                pl.BlockSpec((1, 1, 1, t), lambda b, j: (b, j, 0, 0)),
                pl.BlockSpec((1, 1, 1, t), lambda b, j: (b, j, 0, 0)),
            ],
        ),
        compiler_params=pltpu.CompilerParams(
            dimension_semantics=("parallel", "parallel")),
    )(z3, e_nd, e_dn, e2)

    # legacy loss: mean((zq.detach()-z)^2) + beta*mean((zq - z.detach())^2);
    # both terms equal mean((zq - z)^2) numerically in the forward pass.
    mean_sq = jnp.sum(loss4) / jnp.float32(B * HW * e_dim)
    loss = (1.0 + beta) * mean_sq

    # z + (z_q - z).detach() == z_q numerically; returned directly.
    z_q = zq3.reshape(B, C, H, W)
    min_encoding_indices = idx4.reshape(B * HW)
    return z_q, loss, min_encoding_indices


def _reference_forward(z_nchw, embedding, beta=0.25):
    """Pure-JAX mirror of the PyTorch forward (also returns the distance matrix
    for tie-aware validation)."""
    B, C, H, W = z_nchw.shape
    z = jnp.transpose(z_nchw, (0, 2, 3, 1)).reshape(-1, C)
    d = (jnp.sum(z ** 2, axis=1, keepdims=True)
         + jnp.sum(embedding ** 2, axis=1)
         - 2.0 * z @ embedding.T)
    idx = jnp.argmin(d, axis=1)
    zq = embedding[idx]
    loss = jnp.mean((zq - z) ** 2) + beta * jnp.mean((zq - z) ** 2)
    zq_nchw = jnp.transpose(zq.reshape(B, H, W, C), (0, 3, 1, 2))
    return zq_nchw, loss, idx, d


if __name__ == "__main__":
    # module hyper-params
    n_e = 128       # codebook size
    e_dim = 32      # embedding dim == channel count
    beta = 0.25

    # small input consistent with the forward: z is (B, C=e_dim, H, W)
    B, H, W = 2, 16, 16

    key = jax.random.PRNGKey(0)
    k_z, k_e = jax.random.split(key)
    z = jax.random.normal(k_z, (B, e_dim, H, W), dtype=jnp.float32)
    # embedding.weight.data.uniform_(-1/n_e, 1/n_e), deterministic
    embedding = jax.random.uniform(
        k_e, (n_e, e_dim), dtype=jnp.float32,
        minval=-1.0 / n_e, maxval=1.0 / n_e)

    z_q, loss, inds = vector_quantizer2_forward(z, embedding, beta=beta)
    jax.block_until_ready((z_q, loss, inds))

    assert z_q.shape == (B, e_dim, H, W)
    assert inds.shape == (B * H * W,)

    # ---- validation against a pure-JAX mirror of the PyTorch forward ----
    zq_ref, loss_ref, idx_ref, d_ref = _reference_forward(z, embedding, beta=beta)

    idx_k = np.asarray(inds)
    idx_r = np.asarray(idx_ref)
    d_np = np.asarray(d_ref)
    M = idx_k.shape[0]
    rows = np.arange(M)

    # 1) chosen codes must be optimal up to fp near-ties (the kernel drops the
    #    constant ||z||^2 term, which can only reorder exact fp near-ties).
    gap = d_np[rows, idx_k] - d_np[rows, idx_r]
    assert np.all(gap <= 1e-3), f"non-optimal code assignment (max gap {gap.max()})"
    match = idx_k == idx_r

    # 2) z_q rows are exactly the selected codebook entries (gather correctness).
    zq_k_flat = np.asarray(jnp.transpose(z_q, (0, 2, 3, 1)).reshape(-1, e_dim))
    np.testing.assert_allclose(zq_k_flat, np.asarray(embedding)[idx_k],
                               rtol=1e-5, atol=1e-6)

    # 3) where indices agree (everywhere barring fp ties), z_q matches the reference.
    zq_r_flat = np.asarray(jnp.transpose(zq_ref, (0, 2, 3, 1)).reshape(-1, e_dim))
    np.testing.assert_allclose(zq_k_flat[match], zq_r_flat[match],
                               rtol=1e-5, atol=1e-6)

    # 4) loss matches the reference.
    np.testing.assert_allclose(float(loss), float(loss_ref), rtol=1e-4, atol=1e-6)

    print("KERNEL_OK")
</pallas_src>

<mosaic_0001>
module attributes {stable_mosaic.version = 11 : i64} {
  func.func @_vq_kernel(%arg0: i32, %arg1: i32, %arg2: memref<1x32x256xf32, #tpu.memory_space<vmem>>, %arg3: memref<128x32xf32, #tpu.memory_space<vmem>>, %arg4: memref<32x128xf32, #tpu.memory_space<vmem>>, %arg5: memref<128x1xf32, #tpu.memory_space<vmem>>, %arg6: memref<1x32x256xf32, #tpu.memory_space<vmem>>, %arg7: memref<1x1x1x256xi32, #tpu.memory_space<vmem>>, %arg8: memref<1x1x1x256xf32, #tpu.memory_space<vmem>>) attributes {dimension_semantics = [#tpu.dimension_semantics<parallel>, #tpu.dimension_semantics<parallel>], iteration_bounds = array<i64: 2, 1>, scalar_prefetch = 0 : i64, scratch_operands = 0 : i64, tpu.core_type = #tpu.core_type<tc>, window_params = [{transform_indices = @transform_0, window_bounds = array<i64: 1, 32, 256>}, {pipeline_mode = #tpu.pipeline_mode<synchronous>, transform_indices = @transform_1, window_bounds = array<i64: 128, 32>}, {pipeline_mode = #tpu.pipeline_mode<synchronous>, transform_indices = @transform_2, window_bounds = array<i64: 32, 128>}, {pipeline_mode = #tpu.pipeline_mode<synchronous>, transform_indices = @transform_3, window_bounds = array<i64: 128, 1>}, {transform_indices = @transform_4, window_bounds = array<i64: 1, 32, 256>}, {transform_indices = @transform_5, window_bounds = array<i64: 1, 1, 1, 256>}, {transform_indices = @transform_6, window_bounds = array<i64: 1, 1, 1, 256>}]} {
    %c0 = arith.constant 0 : index
    %c0_0 = arith.constant 0 : index
    %c0_1 = arith.constant 0 : index
    %0 = vector.load %arg2[%c0, %c0_0, %c0_1] : memref<1x32x256xf32, #tpu.memory_space<vmem>>, vector<1x32x256xf32>
    %1 = vector.shape_cast %0 : vector<1x32x256xf32> to vector<32x256xf32>
    %c0_2 = arith.constant 0 : index
    %c0_3 = arith.constant 0 : index
    %2 = vector.load %arg3[%c0_2, %c0_3] : memref<128x32xf32, #tpu.memory_space<vmem>>, vector<128x32xf32>
    %c0_4 = arith.constant 0 : index
    %c0_5 = arith.constant 0 : index
    %3 = vector.load %arg4[%c0_4, %c0_5] : memref<32x128xf32, #tpu.memory_space<vmem>>, vector<32x128xf32>
    %c0_6 = arith.constant 0 : index
    %c0_7 = arith.constant 0 : index
    %4 = vector.load %arg5[%c0_6, %c0_7] : memref<128x1xf32, #tpu.memory_space<vmem>>, vector<128x1xf32>
    %cst = arith.constant dense<0.000000e+00> : vector<128x256xf32>
    %5 = tpu.matmul %2, %1, %cst {dimension_numbers = #tpu.dot_dimension_numbers<[1], [0], [0], [1], [0, 0, 1, 1], [], []>} : vector<128x32xf32>, vector<32x256xf32>, vector<128x256xf32> -> vector<128x256xf32>
    %cst_8 = arith.constant 2.000000e+00 : f32
    %6 = vector.broadcast %cst_8 : f32 to vector<128x256xf32>
    %7 = arith.mulf %6, %5 : vector<128x256xf32>
    %8 = vector.broadcast %4 : vector<128x1xf32> to vector<128x256xf32>
    %9 = arith.subf %8, %7 : vector<128x256xf32>
    %10 = tpu.iota {dimensions = array<i32: 0>} : vector<128x256xi32>
    %cst_9 = arith.constant dense<0x7F800000> : vector<256xf32>
    %11 = vector.multi_reduction <minimumf>, %9, %cst_9 [0] : vector<128x256xf32> to vector<256xf32>
    %12 = vector.shape_cast %11 : vector<256xf32> to vector<1x256xf32>
    %13 = vector.broadcast %12 : vector<1x256xf32> to vector<128x256xf32>
    %14 = arith.cmpf oeq, %9, %13 : vector<128x256xf32>
    %c128_i32 = arith.constant 128 : i32
    %15 = vector.broadcast %c128_i32 : i32 to vector<128x256xi32>
    %16 = arith.select %14, %10, %15 : vector<128x256xi1>, vector<128x256xi32>
    %cst_10 = arith.constant dense<2147483647> : vector<256xi32>
    %17 = vector.multi_reduction <minsi>, %16, %cst_10 [0] : vector<128x256xi32> to vector<256xi32>
    %18 = vector.shape_cast %17 : vector<256xi32> to vector<1x256xi32>
    %19 = vector.broadcast %18 : vector<1x256xi32> to vector<128x256xi32>
    %20 = arith.cmpi eq, %10, %19 : vector<128x256xi32>
    %21 = arith.extui %20 : vector<128x256xi1> to vector<128x256xi32>
    %22 = arith.sitofp %21 : vector<128x256xi32> to vector<128x256xf32>
    %cst_11 = arith.constant dense<0.000000e+00> : vector<32x256xf32>
    %23 = tpu.matmul %3, %22, %cst_11 {dimension_numbers = #tpu.dot_dimension_numbers<[1], [0], [0], [1], [0, 0, 1, 1], [], []>} : vector<32x128xf32>, vector<128x256xf32>, vector<32x256xf32> -> vector<32x256xf32>
    %c0_12 = arith.constant 0 : index
    %c0_13 = arith.constant 0 : index
    %c0_14 = arith.constant 0 : index
    %24 = vector.load %arg6[%c0_12, %c0_13, %c0_14] : memref<1x32x256xf32, #tpu.memory_space<vmem>>, vector<1x32x256xf32>
    %25 = vector.shape_cast %24 : vector<1x32x256xf32> to vector<32x256xf32>
    %26 = vector.shape_cast %23 : vector<32x256xf32> to vector<1x32x256xf32>
    tpu.vector_store %arg6[%c0_12, %c0_13, %c0_14], %26 {strides = array<i32>} : memref<1x32x256xf32, #tpu.memory_space<vmem>>, vector<1x32x256xf32>,
    %c0_15 = arith.constant 0 : index
    %c0_16 = arith.constant 0 : index
    %c0_17 = arith.constant 0 : index
    %c0_18 = arith.constant 0 : index
    %27 = vector.load %arg7[%c0_15, %c0_16, %c0_17, %c0_18] : memref<1x1x1x256xi32, #tpu.memory_space<vmem>>, vector<1x1x1x256xi32>
    %28 = vector.shape_cast %27 : vector<1x1x1x256xi32> to vector<1x256xi32>
    %29 = vector.shape_cast %18 : vector<1x256xi32> to vector<1x1x1x256xi32>
    tpu.vector_store %arg7[%c0_15, %c0_16, %c0_17, %c0_18], %29 {strides = array<i32>} : memref<1x1x1x256xi32, #tpu.memory_space<vmem>>, vector<1x1x1x256xi32>,
    %30 = arith.subf %23, %1 : vector<32x256xf32>
    %31 = arith.mulf %30, %30 : vector<32x256xf32>
    %cst_19 = arith.constant dense<0.000000e+00> : vector<256xf32>
    %32 = vector.multi_reduction <add>, %31, %cst_19 [0] : vector<32x256xf32> to vector<256xf32>
    %33 = vector.shape_cast %32 : vector<256xf32> to vector<1x256xf32>
    %c0_20 = arith.constant 0 : index
    %c0_21 = arith.constant 0 : index
    %c0_22 = arith.constant 0 : index
    %c0_23 = arith.constant 0 : index
    %34 = vector.load %arg8[%c0_20, %c0_21, %c0_22, %c0_23] : memref<1x1x1x256xf32, #tpu.memory_space<vmem>>, vector<1x1x1x256xf32>
    %35 = vector.shape_cast %34 : vector<1x1x1x256xf32> to vector<1x256xf32>
    %36 = vector.shape_cast %33 : vector<1x256xf32> to vector<1x1x1x256xf32>
    tpu.vector_store %arg8[%c0_20, %c0_21, %c0_22, %c0_23], %36 {strides = array<i32>} : memref<1x1x1x256xf32, #tpu.memory_space<vmem>>, vector<1x1x1x256xf32>,
    return
  }
  func.func @transform_0(%arg0: i32, %arg1: i32) -> (i32, i32, i32) {
    %c0_i32 = arith.constant 0 : i32
    %c0_i32_0 = arith.constant 0 : i32
    return %arg0, %c0_i32, %arg1 : i32, i32, i32
  }
  func.func @transform_1(%arg0: i32, %arg1: i32) -> (i32, i32) {
    %c0_i32 = arith.constant 0 : i32
    %c0_i32_0 = arith.constant 0 : i32
    %c0_i32_1 = arith.constant 0 : i32
    return %c0_i32, %c0_i32_0 : i32, i32
  }
  func.func @transform_2(%arg0: i32, %arg1: i32) -> (i32, i32) {
    %c0_i32 = arith.constant 0 : i32
    %c0_i32_0 = arith.constant 0 : i32
    %c0_i32_1 = arith.constant 0 : i32
    return %c0_i32, %c0_i32_0 : i32, i32
  }
  func.func @transform_3(%arg0: i32, %arg1: i32) -> (i32, i32) {
    %c0_i32 = arith.constant 0 : i32
    %c0_i32_0 = arith.constant 0 : i32
    %c0_i32_1 = arith.constant 0 : i32
    return %c0_i32, %c0_i32_0 : i32, i32
  }
  func.func @transform_4(%arg0: i32, %arg1: i32) -> (i32, i32, i32) {
    %c0_i32 = arith.constant 0 : i32
    %c0_i32_0 = arith.constant 0 : i32
    return %arg0, %c0_i32, %arg1 : i32, i32, i32
  }
  func.func @transform_5(%arg0: i32, %arg1: i32) -> (i32, i32, i32, i32) {
    %c0_i32 = arith.constant 0 : i32
    %c0_i32_0 = arith.constant 0 : i32
    %c0_i32_1 = arith.constant 0 : i32
    return %arg0, %arg1, %c0_i32, %c0_i32_0 : i32, i32, i32, i32
  }
  func.func @transform_6(%arg0: i32, %arg1: i32) -> (i32, i32, i32, i32) {
    %c0_i32 = arith.constant 0 : i32
    %c0_i32_0 = arith.constant 0 : i32
    %c0_i32_1 = arith.constant 0 : i32
    return %arg0, %arg1, %c0_i32, %c0_i32_0 : i32, i32, i32, i32
  }
}

</mosaic_0001>

<llo_original>
// kernel: vector_quantizer2_forward.1
$region0: #{vector_quantizer2_forward.1}
  #allocation0 [shape = 'u32[]', space=smem, size = 0x4, offset = 0x4, fixed_abs, tag = 'smem constant byte address 0x4 - core index']
  #allocation1 [shape = 'u32[144,128]{1,0:T(1,128)}', space=vmem, size = 0x12000, scoped, tag = 'internal scratch']
  %s0 = inlined_call_operand.vmem [shape: f32[2,32,256], index: 0, kind: input, shape index: {}]
  %s1 = inlined_call_operand.vmem [shape: f32[128,32], index: 1, kind: input, shape index: {}]
  %s2 = inlined_call_operand.vmem [shape: f32[32,128], index: 2, kind: input, shape index: {}]
  %s3 = inlined_call_operand.vmem [shape: f32[128,1], index: 3, kind: input, shape index: {}]
  %s4 = inlined_call_operand.vmem [shape: f32[2,32,256], index: 4, kind: output, shape index: {0}]
  %s5 = inlined_call_operand.hbm [shape: s32[2,1,1,256], index: 5, kind: output, shape index: {1}]
  %s6 = inlined_call_operand.vmem [shape: f32[2,1,1,256], index: 6, kind: output, shape index: {2}]
  %7 = xla_tuple %s4, %s5, %s6
  %s8 = sld [smem:[#allocation0]]
  $region65: #{vector_quantizer2_forward.1} parent=0
    _
  %s10 = ssub.s32 1, %s8
  %s11 = scalar_select 0, %s10, %s8
  $region1: #{vector_quantizer2_forward.1} parent=0
    #allocation2 [shape = 'u8[2048]{0}', space=vmem, size = 0x800, scoped, tag = 'output window, operand 1']
    #allocation3 [shape = 's32[2]{0}', space=sflag, size = 0x8, scoped, tag = 'scoped memory for vector_quantizer2_forward.1']
    %12 = vsyncpa [#allocation3], 0
    %s13 = scalar_lea.sflag [#allocation3], 1
    %14 = vsyncpa %s13, 0
    loop: start=0, step=1, limit=4
    $region2: #{vector_quantizer2_forward.1} parent=1 // loop_pre_header
      _
    $region3: #{vector_quantizer2_forward.1} parent=1 // loop_header
      %s16 = sphi 0, %s20
      %p17 = scmp.ge.s32.totalorder %s16, 4
      %s23 = sphi 0, %s35
      %s24 = sphi 0, %s31
      %s25 = sphi 0, %s23
      %s26 = sphi 0, %s24
      %s27 = sphi 0, %s25
      %s28 = sphi 0, %s26
      %s40 = sphi 0, %s42
      %s43 = sphi 0, %s40
      %s44 = sphi 0, %s43
      %s60 = sphi 0, %s44
      %s64 = sphi 0, %s64
      %s66 = sphi 0, %s64
      %s67 = sphi 0, %s66
      %s81 = sphi 0, %s67
      %s85 = sphi 0, %s85
      %s87 = sphi 0, %s85
      %s88 = sphi 0, %s87
      %s102 = sphi 0, %s88
      %s106 = sphi 0, %s106
      %s108 = sphi 0, %s106
      %s109 = sphi 0, %s108
      %s123 = sphi 0, %s109
      %s131 = sphi 0, %s133
      %s134 = sphi 0, %s131
      %s135 = sphi 0, %s134
      %s151 = sphi 0, %s135
      %s159 = sphi 0, %s161
      %s162 = sphi 0, %s159
      %s163 = sphi 0, %s162
      %s179 = sphi 0, %s163
      %s187 = sphi 0, %s189
      %s190 = sphi 0, %s187
      %s191 = sphi 0, %s190
      %s207 = sphi 0, %s191
    $region4: #{vector_quantizer2_forward.1} parent=1 // loop_header_branch
      %19 = sbr.rel (%p17) target = $region8
    $region5: #{vector_quantizer2_forward.1} parent=1 // loop_body
      %s21 = ssub.s32 %s16, 1
      %s22 = ssub.s32 %s16, 2
      %s29 = sadd.s32 1, %s24
      %p30 = scmp.ge.s32.totalorder %s29, 1
      %s31 = scalar_select %p30, 0, %s29
      %s32 = sadd.s32 1, %s23
      %s33 = scalar_select %p30, %s32, %s23
      %p34 = scmp.ge.s32.totalorder %s33, 2
      %s35 = scalar_select %p34, 0, %s33
      %s36 = ssub.s32 %s23, %s35
      %s37 = ssub.s32 %s24, %s31
      %s38 = sor.u32 %s36, %s37
      %p39 = scmp.eq.s32.totalorder %s38, 0
      %s41 = sadd.s32 %s40, 1
      %s42 = scalar_select %p39, %s40, %s41
      %p45 = pneg %p39
      %p46 = scmp.eq.s32.totalorder %s16, 1
      %p47 = por %p45, %p46
      %p48 = scmp.ne.s32.totalorder %s40, %s43
      %p49 = scmp.eq.s32.totalorder %s16, 0
      %p50 = por %p48, %p49
      %p51 = scmp.ne.s32.totalorder %s40, %s43
      %p52 = scmp.eq.s32.totalorder %s21, 1
      %p53 = por %p51, %p52
      %p54 = scmp.ne.s32.totalorder %s43, %s44
      %p55 = scmp.eq.s32.totalorder %s21, 0
      %p56 = por %p54, %p55
      %p57 = scmp.ne.s32.totalorder %s43, %s44
      %p58 = scmp.eq.s32.totalorder %s22, 1
      %p59 = por %p57, %p58
      %p61 = scmp.ne.s32.totalorder %s44, %s60
      %p62 = scmp.eq.s32.totalorder %s22, 0
      %p63 = por %p61, %p62
      %s65 = sadd.s32 %s64, 1
      %p68 = scmp.eq.s32.totalorder %s16, 1
      %p69 = scmp.ne.s32.totalorder %s64, %s66
      %p70 = scmp.eq.s32.totalorder %s16, 0
      %p71 = por %p69, %p70
      %p72 = scmp.ne.s32.totalorder %s64, %s66
      %p73 = scmp.eq.s32.totalorder %s21, 1
      %p74 = por %p72, %p73
      %p75 = scmp.ne.s32.totalorder %s66, %s67
      %p76 = scmp.eq.s32.totalorder %s21, 0
      %p77 = por %p75, %p76
      %p78 = scmp.ne.s32.totalorder %s66, %s67
      %p79 = scmp.eq.s32.totalorder %s22, 1
      %p80 = por %p78, %p79
      %p82 = scmp.ne.s32.totalorder %s67, %s81
      %p83 = scmp.eq.s32.totalorder %s22, 0
      %p84 = por %p82, %p83
      %s86 = sadd.s32 %s85, 1
      %p89 = scmp.eq.s32.totalorder %s16, 1
      %p90 = scmp.ne.s32.totalorder %s85, %s87
      %p91 = scmp.eq.s32.totalorder %s16, 0
      %p92 = por %p90, %p91
      %p93 = scmp.ne.s32.totalorder %s85, %s87
      %p94 = scmp.eq.s32.totalorder %s21, 1
      %p95 = por %p93, %p94
      %p96 = scmp.ne.s32.totalorder %s87, %s88
      %p97 = scmp.eq.s32.totalorder %s21, 0
      %p98 = por %p96, %p97
      %p99 = scmp.ne.s32.totalorder %s87, %s88
      %p100 = scmp.eq.s32.totalorder %s22, 1
      %p101 = por %p99, %p100
      %p103 = scmp.ne.s32.totalorder %s88, %s102
      %p104 = scmp.eq.s32.totalorder %s22, 0
      %p105 = por %p103, %p104
      %s107 = sadd.s32 %s106, 1
      %p110 = scmp.eq.s32.totalorder %s16, 1
      %p111 = scmp.ne.s32.totalorder %s106, %s108
      %p112 = scmp.eq.s32.totalorder %s16, 0
      %p113 = por %p111, %p112
      %p114 = scmp.ne.s32.totalorder %s106, %s108
      %p115 = scmp.eq.s32.totalorder %s21, 1
      %p116 = por %p114, %p115
      %p117 = scmp.ne.s32.totalorder %s108, %s109
      %p118 = scmp.eq.s32.totalorder %s21, 0
      %p119 = por %p117, %p118
      %p120 = scmp.ne.s32.totalorder %s108, %s109
      %p121 = scmp.eq.s32.totalorder %s22, 1
      %p122 = por %p120, %p121
      %p124 = scmp.ne.s32.totalorder %s109, %s123
      %p125 = scmp.eq.s32.totalorder %s22, 0
      %p126 = por %p124, %p125
      %s127 = ssub.s32 %s23, %s35
      %s128 = ssub.s32 %s24, %s31
      %s129 = sor.u32 %s127, %s128
      %p130 = scmp.eq.s32.totalorder %s129, 0
      %s132 = sadd.s32 %s131, 1
      %s133 = scalar_select %p130, %s131, %s132
      %p136 = pneg %p130
      %p137 = scmp.eq.s32.totalorder %s16, 1
      %p138 = por %p136, %p137
      %p139 = scmp.ne.s32.totalorder %s131, %s134
      %p140 = scmp.eq.s32.totalorder %s16, 0
      %p141 = por %p139, %p140
      %p142 = scmp.ne.s32.totalorder %s131, %s134
      %p143 = scmp.eq.s32.totalorder %s21, 1
      %p144 = por %p142, %p143
      %p145 = scmp.ne.s32.totalorder %s134, %s135
      %p146 = scmp.eq.s32.totalorder %s21, 0
      %p147 = por %p145, %p146
      %p148 = scmp.ne.s32.totalorder %s134, %s135
      %p149 = scmp.eq.s32.totalorder %s22, 1
      %p150 = por %p148, %p149
      %p152 = scmp.ne.s32.totalorder %s135, %s151
      %p153 = scmp.eq.s32.totalorder %s22, 0
      %p154 = por %p152, %p153
      %s155 = ssub.s32 %s23, %s35
      %s156 = ssub.s32 %s24, %s31
      %s157 = sor.u32 %s155, %s156
      %p158 = scmp.eq.s32.totalorder %s157, 0
      %s160 = sadd.s32 %s159, 1
      %s161 = scalar_select %p158, %s159, %s160
      %p164 = pneg %p158
      %p165 = scmp.eq.s32.totalorder %s16, 1
      %p166 = por %p164, %p165
      %p167 = scmp.ne.s32.totalorder %s159, %s162
      %p168 = scmp.eq.s32.totalorder %s16, 0
      %p169 = por %p167, %p168
      %p170 = scmp.ne.s32.totalorder %s159, %s162
      %p171 = scmp.eq.s32.totalorder %s21, 1
      %p172 = por %p170, %p171
      %p173 = scmp.ne.s32.totalorder %s162, %s163
      %p174 = scmp.eq.s32.totalorder %s21, 0
      %p175 = por %p173, %p174
      %p176 = scmp.ne.s32.totalorder %s162, %s163
      %p177 = scmp.eq.s32.totalorder %s22, 1
      %p178 = por %p176, %p177
      %p180 = scmp.ne.s32.totalorder %s163, %s179
      %p181 = scmp.eq.s32.totalorder %s22, 0
      %p182 = por %p180, %p181
      %s183 = ssub.s32 %s23, %s35
      %s184 = ssub.s32 %s24, %s31
      %s185 = sor.u32 %s183, %s184
      %p186 = scmp.eq.s32.totalorder %s185, 0
      %s188 = sadd.s32 %s187, 1
      %s189 = scalar_select %p186, %s187, %s188
      %p192 = pneg %p186
      %p193 = scmp.eq.s32.totalorder %s16, 1
      %p194 = por %p192, %p193
      %p195 = scmp.ne.s32.totalorder %s187, %s190
      %p196 = scmp.eq.s32.totalorder %s16, 0
      %p197 = por %p195, %p196
      %p198 = scmp.ne.s32.totalorder %s187, %s190
      %p199 = scmp.eq.s32.totalorder %s21, 1
      %p200 = por %p198, %p199
      %p201 = scmp.ne.s32.totalorder %s190, %s191
      %p202 = scmp.eq.s32.totalorder %s21, 0
      %p203 = por %p201, %p202
      %p204 = scmp.ne.s32.totalorder %s190, %s191
      %p205 = scmp.eq.s32.totalorder %s22, 1
      %p206 = por %p204, %p205
      %p208 = scmp.ne.s32.totalorder %s191, %s207
      %p209 = scmp.eq.s32.totalorder %s22, 0
      %p210 = por %p208, %p209
      %p211 = scmp.le.s32.totalorder 1, %s16
      %p212 = scmp.lt.s32.totalorder %s16, 3
      %p213 = pnand %p211, %p212
      %p214 = pneg %p213
      // Predicated region
      $region9: #{vector_quantizer2_forward.1} parent=5 // pred_check
        _
      $region10: #{vector_quantizer2_forward.1} parent=5 // pred_check_branch
        %216 = sbr.rel (%p213) target = $region12
      $region11: #{vector_quantizer2_forward.1} parent=5 // pred_region
        %s217 = ssub.s32 %s16, 1
        // Predicated region
        $region13: #{vector_quantizer2_forward.1} parent=11 // pred_check
          %p218 = pneg %p77
        $region14: #{vector_quantizer2_forward.1} parent=11 // pred_check_branch
          %220 = sbr.rel (%p218) target = $region16
        $region15: #{vector_quantizer2_forward.1} parent=11 // pred_region
          _
        $region16: #{vector_quantizer2_forward.1} parent=11 // pred_fallthru
          _
        // Predicated region
        $region17: #{vector_quantizer2_forward.1} parent=11 // pred_check
          %p221 = pneg %p98
        $region18: #{vector_quantizer2_forward.1} parent=11 // pred_check_branch
          %223 = sbr.rel (%p221) target = $region20
        $region19: #{vector_quantizer2_forward.1} parent=11 // pred_region
          _
        $region20: #{vector_quantizer2_forward.1} parent=11 // pred_fallthru
          _
        // Predicated region
        $region21: #{vector_quantizer2_forward.1} parent=11 // pred_check
          %p224 = pneg %p119
        $region22: #{vector_quantizer2_forward.1} parent=11 // pred_check_branch
          %226 = sbr.rel (%p224) target = $region24
        $region23: #{vector_quantizer2_forward.1} parent=11 // pred_region
          _
        $region24: #{vector_quantizer2_forward.1} parent=11 // pred_fallthru
          _
      $region12: #{vector_quantizer2_forward.1} parent=5 // pred_fallthru
        _
      %p227 = scmp.lt.s32.totalorder %s16, 2
      // Predicated region
      $region25: #{vector_quantizer2_forward.1} parent=5 // pred_check
        %p228 = pneg %p227
      $region26: #{vector_quantizer2_forward.1} parent=5 // pred_check_branch
        %230 = sbr.rel (%p228) target = $region28
      $region27: #{vector_quantizer2_forward.1} parent=5 // pred_region
        // Predicated region
        $region29: #{vector_quantizer2_forward.1} parent=27 // pred_check
          %p231 = pneg %p50
        $region30: #{vector_quantizer2_forward.1} parent=27 // pred_check_branch
          %233 = sbr.rel (%p231) target = $region32
        $region31: #{vector_quantizer2_forward.1} parent=27 // pred_region
          %s234 = smul.u32 2, %s24
          %p235 = scmp.lt.s32.totalorder %s23, 1
          %s236 = scalar_select %p235, %s23, 1
          %p237 = scmp.lt.s32.totalorder %s234, 1
          %s238 = scalar_select %p237, %s234, 1
          %s239 = smul.addr %s236, 8
          %s240 = sadd.s32 %s238, %s239
          %s241 = smul.addr %s240, 8
          %s242 = scalar_lea.vmem %s0, %s241
          %s243 = smul.u32 2, %s24
        $region32: #{vector_quantizer2_forward.1} parent=27 // pred_fallthru
          _
      $region28: #{vector_quantizer2_forward.1} parent=5 // pred_fallthru
        _
      %p244 = scmp.le.s32.totalorder 1, %s16
      %p245 = scmp.lt.s32.totalorder %s16, 3
      %p246 = pnand %p244, %p245
      %p247 = pneg %p246
      // Predicated region
      $region33: #{vector_quantizer2_forward.1} parent=5 // pred_check
        _
      $region34: #{vector_quantizer2_forward.1} parent=5 // pred_check_branch
        %249 = sbr.rel (%p246) target = $region36
      $region35: #{vector_quantizer2_forward.1} parent=5 // pred_region
        %s250 = ssub.s32 %s16, 1
        %s251 = smul.u32 2, %s26
        %p252 = scmp.lt.s32.totalorder %s25, 1
        %s253 = scalar_select %p252, %s25, 1
        %p254 = scmp.lt.s32.totalorder %s251, 1
        %s255 = scalar_select %p254, %s251, 1
        %s256 = smul.addr %s253, 8
        %s257 = sadd.s32 %s255, %s256
        %s258 = smul.addr %s257, 8
        %s259 = scalar_lea.vmem %s0, %s258
        %p260 = pneg %p56
        %p261 = pneg %p53
        %p262 = pneg %p77
        %p263 = pneg %p74
        %p264 = pneg %p98
        %p265 = pneg %p95
        %p266 = pneg %p119
        %p267 = pneg %p116
        %p268 = pneg %p147
        %p269 = pneg %p144
        %s270 = smul.u32 2, %s26
        %p271 = scmp.lt.s32.totalorder %s25, 1
        %s272 = scalar_select %p271, %s25, 1
        %p273 = scmp.lt.s32.totalorder %s270, 1
        %s274 = scalar_select %p273, %s270, 1
        %s275 = smul.addr %s272, 8
        %s276 = sadd.s32 %s274, %s275
        %s277 = smul.addr %s276, 8
        %s278 = scalar_lea.vmem %s4, %s277
        %p279 = pneg %p175
        %p280 = pneg %p172
        %s281 = sand.u32 %s162, 1
        %s282 = scalar_lea.sflag [#allocation3], %s281
        %s283 = sand.u32 %s162, 1
        %s284 = smul.addr %s283, 2
        %s285 = scalar_lea.vmem [#allocation2], %s284
        %p286 = pneg %p203
        %p287 = pneg %p200
        %p288 = scmp.lt.s32.totalorder %s25, 1
        %s289 = scalar_select %p288, %s25, 1
        %p290 = scmp.lt.s32.totalorder %s26, 0
        %s291 = scalar_select %p290, %s26, 0
        %s292 = smul.addr %s291, 2
        %s293 = smul.addr %s289, 2
        %s294 = sadd.s32 %s292, %s293
        %s295 = scalar_lea.vmem %s6, %s294
        %s296 = smul.u32 2, %s26
        %p297 = scmp.lt.s32.totalorder %s25, 1
        %s298 = scalar_select %p297, %s25, 1
        %p299 = scmp.lt.s32.totalorder %s296, 1
        %s300 = scalar_select %p299, %s296, 1
        %s301 = smul.addr %s298, 8
        %s302 = sadd.s32 %s300, %s301
        %s303 = smul.addr %s302, 8
        %s304 = scalar_lea.vmem %s0, %s303
        %s305 = smul.u32 2, %s26
        %s306 = smul.u32 2, %s26
        %p307 = scmp.lt.s32.totalorder %s25, 1
        %s308 = scalar_select %p307, %s25, 1
        %p309 = scmp.lt.s32.totalorder %s306, 1
        %s310 = scalar_select %p309, %s306, 1
        %s311 = smul.addr %s308, 8
        %s312 = sadd.s32 %s310, %s311
        %s313 = smul.addr %s312, 8
        %s314 = scalar_lea.vmem %s4, %s313
        %s315 = smul.u32 2, %s26
        %p316 = scmp.lt.s32.totalorder %s25, 1
        %s317 = scalar_select %p316, %s25, 1
        %p318 = scmp.lt.s32.totalorder %s26, 0
        %s319 = scalar_select %p318, %s26, 0
        %s320 = smul.addr %s319, 2
        %s321 = smul.addr %s317, 2
        %s322 = sadd.s32 %s320, %s321
        %s323 = scalar_lea.vmem %s6, %s322
        %v324 = vld [vmem:[%s304] sm:$0xff]
        %v325 = vld [vmem:[%s304 + $0x8] sm:$0xff]
        %v326 = vld [vmem:[%s304 + $0x10] sm:$0xff]
        %v327 = vld [vmem:[%s304 + $0x18] sm:$0xff]
        %v328 = vld [vmem:[%s304 + $0x20] sm:$0xff]
        %v329 = vld [vmem:[%s304 + $0x28] sm:$0xff]
        %v330 = vld [vmem:[%s304 + $0x30] sm:$0xff]
        %v331 = vld [vmem:[%s304 + $0x38] sm:$0xff]
        %v332 = vld [vmem:[%s1] sm:$0xff]
        %v333 = vld [vmem:[%s1 + $0x8] sm:$0xff]
        %v334 = vld [vmem:[%s1 + $0x10] sm:$0xff]
        %v335 = vld [vmem:[%s1 + $0x18] sm:$0xff]
        %v336 = vld [vmem:[%s1 + $0x20] sm:$0xff]
        %v337 = vld [vmem:[%s1 + $0x28] sm:$0xff]
        %v338 = vld [vmem:[%s1 + $0x30] sm:$0xff]
        %v339 = vld [vmem:[%s1 + $0x38] sm:$0xff]
        %v340 = vld [vmem:[%s1 + $0x40] sm:$0xff]
        %v341 = vld [vmem:[%s1 + $0x48] sm:$0xff]
        %v342 = vld [vmem:[%s1 + $0x50] sm:$0xff]
        %v343 = vld [vmem:[%s1 + $0x58] sm:$0xff]
        %v344 = vld [vmem:[%s1 + $0x60] sm:$0xff]
        %v345 = vld [vmem:[%s1 + $0x68] sm:$0xff]
        %v346 = vld [vmem:[%s1 + $0x70] sm:$0xff]
        %v347 = vld [vmem:[%s1 + $0x78] sm:$0xff]
        %v348 = vld [vmem:[%s2] sm:$0xff]
        %v349 = vld [vmem:[%s2 + $0x8] sm:$0xff]
        %v350 = vld [vmem:[%s2 + $0x10] sm:$0xff]
        %v351 = vld [vmem:[%s2 + $0x18] sm:$0xff]
        %v352 = vld [vmem:[%s3] sm:$0xff]
        %v353 = vld [vmem:[%s3 + $0x8] sm:$0xff]
        %v354 = vld [vmem:[%s3 + $0x10] sm:$0xff]
        %v355 = vld [vmem:[%s3 + $0x18] sm:$0xff]
        %v356 = vld [vmem:[%s3 + $0x20] sm:$0xff]
        %v357 = vld [vmem:[%s3 + $0x28] sm:$0xff]
        %v358 = vld [vmem:[%s3 + $0x30] sm:$0xff]
        %v359 = vld [vmem:[%s3 + $0x38] sm:$0xff]
        %v360 = vld [vmem:[%s3 + $0x40] sm:$0xff]
        %v361 = vld [vmem:[%s3 + $0x48] sm:$0xff]
        %v362 = vld [vmem:[%s3 + $0x50] sm:$0xff]
        %v363 = vld [vmem:[%s3 + $0x58] sm:$0xff]
        %v364 = vld [vmem:[%s3 + $0x60] sm:$0xff]
        %v365 = vld [vmem:[%s3 + $0x68] sm:$0xff]
        %v366 = vld [vmem:[%s3 + $0x70] sm:$0xff]
        %v367 = vld [vmem:[%s3 + $0x78] sm:$0xff]
        %vm368 = vcmask 261120
        %v370 = vsel %vm368, %v332, 0
        %v373 = vsel %vm368, %v333, 0
        %v376 = vsel %vm368, %v334, 0
        %v379 = vsel %vm368, %v335, 0
        %v382 = vsel %vm368, %v336, 0
        %v385 = vsel %vm368, %v337, 0
        %v388 = vsel %vm368, %v338, 0
        %v391 = vsel %vm368, %v339, 0
        %v394 = vsel %vm368, %v340, 0
        %v397 = vsel %vm368, %v341, 0
        %v400 = vsel %vm368, %v342, 0
        %v403 = vsel %vm368, %v343, 0
        %v406 = vsel %vm368, %v344, 0
        %v409 = vsel %vm368, %v345, 0
        %v412 = vsel %vm368, %v346, 0
        %v415 = vsel %vm368, %v347, 0
        %417 = vmatprep.subr.mxu0 %v325
        %418 = vmatpush1.msra.mxu0 %v324
        %419 = vmatprep.subr.mxu0 %v327
        %420 = vmatpush1.msra.mxu0 %v326
        %421 = vmatprep.subr.mxu0 %v329
        %422 = vmatpush1.msra.mxu0 %v328
        %423 = vmatprep.subr.mxu0 %v331
        %424 = vmatpush1.msra.mxu0 %v330
        %425 = vmatprep.subr.mxu0 0.0
        %426 = vmatpush1.msra.mxu0 0.0
        %427 = vmatprep.subr.mxu0 0.0
        %428 = vmatpush1.msra.mxu0 0.0
        %429 = vmatprep.subr.mxu0 0.0
        %430 = vmatpush1.msra.mxu0 0.0
        %431 = vmatprep.subr.mxu0 0.0
        %432 = vmatpush1.msra.mxu0 0.0
        %433 = vmatprep.subr.mxu0 0.0
        %434 = vmatpush1.msra.mxu0 0.0
        %435 = vmatprep.subr.mxu0 0.0
        %436 = vmatpush1.msra.mxu0 0.0
        %437 = vmatprep.subr.mxu0 0.0
        %438 = vmatpush1.msra.mxu0 0.0
        %439 = vmatprep.subr.mxu0 0.0
        %440 = vmatpush1.msra.mxu0 0.0
        %441 = vmatprep.subr.mxu0 0.0
        %442 = vmatpush1.msra.mxu0 0.0
        %443 = vmatprep.subr.mxu0 0.0
        %444 = vmatpush1.msra.mxu0 0.0
        %445 = vmatprep.subr.mxu0 0.0
        %446 = vmatpush1.msra.mxu0 0.0
        %447 = vmatprep.subr.mxu0 0.0
        %448 = vmatpush1.msra.mxu0 0.0
        %449 = vmatprep.subr.mxu0 0.0
        %450 = vmatpush1.msra.mxu0 0.0
        %451 = vmatprep.subr.mxu0 0.0
        %452 = vmatpush1.msra.mxu0 0.0
        %453 = vmatprep.subr.mxu0 0.0
        %454 = vmatpush1.msra.mxu0 0.0
        %455 = vmatprep.subr.mxu0 0.0
        %456 = vmatpush1.msra.mxu0 0.0
        %457 = vmatprep.subr.mxu0 0.0
        %458 = vmatpush1.msra.mxu0 0.0
        %459 = vmatprep.subr.mxu0 0.0
        %460 = vmatpush1.msra.mxu0 0.0
        %461 = vmatprep.subr.mxu0 0.0
        %462 = vmatpush1.msra.mxu0 0.0
        %463 = vmatprep.subr.mxu0 0.0
        %464 = vmatpush1.msra.mxu0 0.0
        %465 = vmatprep.subr.mxu0 0.0
        %466 = vmatpush1.msra.mxu0 0.0
        %467 = vmatprep.subr.mxu0 0.0
        %468 = vmatpush1.msra.mxu0 0.0
        %469 = vmatprep.subr.mxu0 0.0
        %470 = vmatpush1.msra.mxu0 0.0
        %471 = vmatprep.subr.mxu0 0.0
        %472 = vmatpush1.msra.mxu0 0.0
        %473 = vmatprep.subr.mxu0 0.0
        %474 = vmatpush1.msra.mxu0 0.0
        %475 = vmatprep.subr.mxu0 0.0
        %476 = vmatpush1.msra.mxu0 0.0
        %477 = vmatprep.subr.mxu0 0.0
        %478 = vmatpush1.msra.mxu0 0.0
        %479 = vmatprep.subr.mxu0 0.0
        %480 = vmatpush1.msra.mxu0 0.0
        %481 = vmatprep.mubr.f32.mxu0 0.0
        %482 = vmatmul.mubr.f32.gmra.mrb[0].mxu0 %v370
        %v483 = vpop.f32.mrb[0].mxu0
        %v484 = vadd.f32 0.0, %v483
        %v485 = vpop.f32.mrb[0].mxu0
        %v486 = vadd.f32 0.0, %v485
        %487 = vmatprep.mubr.f32.mxu0 0.0
        %488 = vmatmul.mubr.f32.gmra.mrb[0].mxu0 %v373
        %v489 = vpop.f32.mrb[0].mxu0
        %v490 = vadd.f32 0.0, %v489
        %v491 = vpop.f32.mrb[0].mxu0
        %v492 = vadd.f32 0.0, %v491
        %493 = vmatprep.mubr.f32.mxu0 0.0
        %494 = vmatmul.mubr.f32.gmra.mrb[0].mxu0 %v376
        %v495 = vpop.f32.mrb[0].mxu0
        %v496 = vadd.f32 0.0, %v495
        %v497 = vpop.f32.mrb[0].mxu0
        %v498 = vadd.f32 0.0, %v497
        %499 = vmatprep.mubr.f32.mxu0 0.0
        %500 = vmatmul.mubr.f32.gmra.mrb[0].mxu0 %v379
        %v501 = vpop.f32.mrb[0].mxu0
        %v502 = vadd.f32 0.0, %v501
        %v503 = vpop.f32.mrb[0].mxu0
        %v504 = vadd.f32 0.0, %v503
        %505 = vmatprep.mubr.f32.mxu0 0.0
        %506 = vmatmul.mubr.f32.gmra.mrb[0].mxu0 %v382
        %v507 = vpop.f32.mrb[0].mxu0
        %v508 = vadd.f32 0.0, %v507
        %v509 = vpop.f32.mrb[0].mxu0
        %v510 = vadd.f32 0.0, %v509
        %511 = vmatprep.mubr.f32.mxu0 0.0
        %512 = vmatmul.mubr.f32.gmra.mrb[0].mxu0 %v385
        %v513 = vpop.f32.mrb[0].mxu0
        %v514 = vadd.f32 0.0, %v513
        %v515 = vpop.f32.mrb[0].mxu0
        %v516 = vadd.f32 0.0, %v515
        %517 = vmatprep.mubr.f32.mxu0 0.0
        %518 = vmatmul.mubr.f32.gmra.mrb[0].mxu0 %v388
        %v519 = vpop.f32.mrb[0].mxu0
        %v520 = vadd.f32 0.0, %v519
        %v521 = vpop.f32.mrb[0].mxu0
        %v522 = vadd.f32 0.0, %v521
        %523 = vmatprep.mubr.f32.mxu0 0.0
        %524 = vmatmul.mubr.f32.gmra.mrb[0].mxu0 %v391
        %v525 = vpop.f32.mrb[0].mxu0
        %v526 = vadd.f32 0.0, %v525
        %v527 = vpop.f32.mrb[0].mxu0
        %v528 = vadd.f32 0.0, %v527
        %529 = vmatprep.mubr.f32.mxu0 0.0
        %530 = vmatmul.mubr.f32.gmra.mrb[0].mxu0 %v394
        %v531 = vpop.f32.mrb[0].mxu0
        %v532 = vadd.f32 0.0, %v531
        %v533 = vpop.f32.mrb[0].mxu0
        %v534 = vadd.f32 0.0, %v533
        %535 = vmatprep.mubr.f32.mxu0 0.0
        %536 = vmatmul.mubr.f32.gmra.mrb[0].mxu0 %v397
        %v537 = vpop.f32.mrb[0].mxu0
        %v538 = vadd.f32 0.0, %v537
        %v539 = vpop.f32.mrb[0].mxu0
        %v540 = vadd.f32 0.0, %v539
        %541 = vmatprep.mubr.f32.mxu0 0.0
        %542 = vmatmul.mubr.f32.gmra.mrb[0].mxu0 %v400
        %v543 = vpop.f32.mrb[0].mxu0
        %v544 = vadd.f32 0.0, %v543
        %v545 = vpop.f32.mrb[0].mxu0
        %v546 = vadd.f32 0.0, %v545
        %547 = vmatprep.mubr.f32.mxu0 0.0
        %548 = vmatmul.mubr.f32.gmra.mrb[0].mxu0 %v403
        %v549 = vpop.f32.mrb[0].mxu0
        %v550 = vadd.f32 0.0, %v549
        %v551 = vpop.f32.mrb[0].mxu0
        %v552 = vadd.f32 0.0, %v551
        %553 = vmatprep.mubr.f32.mxu0 0.0
        %554 = vmatmul.mubr.f32.gmra.mrb[0].mxu0 %v406
        %v555 = vpop.f32.mrb[0].mxu0
        %v556 = vadd.f32 0.0, %v555
        %v557 = vpop.f32.mrb[0].mxu0
        %v558 = vadd.f32 0.0, %v557
        %559 = vmatprep.mubr.f32.mxu0 0.0
        %560 = vmatmul.mubr.f32.gmra.mrb[0].mxu0 %v409
        %v561 = vpop.f32.mrb[0].mxu0
        %v562 = vadd.f32 0.0, %v561
        %v563 = vpop.f32.mrb[0].mxu0
        %v564 = vadd.f32 0.0, %v563
        %565 = vmatprep.mubr.f32.mxu0 0.0
        %566 = vmatmul.mubr.f32.gmra.mrb[0].mxu0 %v412
        %v567 = vpop.f32.mrb[0].mxu0
        %v568 = vadd.f32 0.0, %v567
        %v569 = vpop.f32.mrb[0].mxu0
        %v570 = vadd.f32 0.0, %v569
        %571 = vmatprep.mubr.f32.mxu0 0.0
        %572 = vmatmul.mubr.f32.gmra.mrb[0].mxu0 %v415
        %v573 = vpop.f32.mrb[0].mxu0
        %v574 = vadd.f32 0.0, %v573
        %v575 = vpop.f32.mrb[0].mxu0
        %v576 = vadd.f32 0.0, %v575
        %577 = vdwg.mxu0
        %v578 = vmul.f32 %v484, 2.0
        %v579 = vmul.f32 %v486, 2.0
        %v580 = vmul.f32 %v490, 2.0
        %v581 = vmul.f32 %v492, 2.0
        %v582 = vmul.f32 %v496, 2.0
        %v583 = vmul.f32 %v498, 2.0
        %v584 = vmul.f32 %v502, 2.0
        %v585 = vmul.f32 %v504, 2.0
        %v586 = vmul.f32 %v508, 2.0
        %v587 = vmul.f32 %v510, 2.0
        %v588 = vmul.f32 %v514, 2.0
        %v589 = vmul.f32 %v516, 2.0
        %v590 = vmul.f32 %v520, 2.0
        %v591 = vmul.f32 %v522, 2.0
        %v592 = vmul.f32 %v526, 2.0
        %v593 = vmul.f32 %v528, 2.0
        %v594 = vmul.f32 %v532, 2.0
        %v595 = vmul.f32 %v534, 2.0
        %v596 = vmul.f32 %v538, 2.0
        %v597 = vmul.f32 %v540, 2.0
        %v598 = vmul.f32 %v544, 2.0
        %v599 = vmul.f32 %v546, 2.0
        %v600 = vmul.f32 %v550, 2.0
        %v601 = vmul.f32 %v552, 2.0
        %v602 = vmul.f32 %v556, 2.0
        %v603 = vmul.f32 %v558, 2.0
        %v604 = vmul.f32 %v562, 2.0
        %v605 = vmul.f32 %v564, 2.0
        %v606 = vmul.f32 %v568, 2.0
        %v607 = vmul.f32 %v570, 2.0
        %v608 = vmul.f32 %v574, 2.0
        %v609 = vmul.f32 %v576, 2.0
        %611 = vset.pattern.permute.xlu0 0
        %612 = vperm.xlu0 %611, %v352
        %v613 = vpop.permute.xlu0 %612
        %616 = vset.pattern.permute.xlu0 0
        %617 = vperm.xlu0 %616, %v353
        %v618 = vpop.permute.xlu0 %617
        %621 = vset.pattern.permute.xlu0 0
        %622 = vperm.xlu0 %621, %v354
        %v623 = vpop.permute.xlu0 %622
        %626 = vset.pattern.permute.xlu0 0
        %627 = vperm.xlu0 %626, %v355
        %v628 = vpop.permute.xlu0 %627
        %631 = vset.pattern.permute.xlu0 0
        %632 = vperm.xlu0 %631, %v356
        %v633 = vpop.permute.xlu0 %632
        %636 = vset.pattern.permute.xlu0 0
        %637 = vperm.xlu0 %636, %v357
        %v638 = vpop.permute.xlu0 %637
        %641 = vset.pattern.permute.xlu0 0
        %642 = vperm.xlu0 %641, %v358
        %v643 = vpop.permute.xlu0 %642
        %646 = vset.pattern.permute.xlu0 0
        %647 = vperm.xlu0 %646, %v359
        %v648 = vpop.permute.xlu0 %647
        %651 = vset.pattern.permute.xlu0 0
        %652 = vperm.xlu0 %651, %v360
        %v653 = vpop.permute.xlu0 %652
        %656 = vset.pattern.permute.xlu0 0
        %657 = vperm.xlu0 %656, %v361
        %v658 = vpop.permute.xlu0 %657
        %661 = vset.pattern.permute.xlu0 0
        %662 = vperm.xlu0 %661, %v362
        %v663 = vpop.permute.xlu0 %662
        %666 = vset.pattern.permute.xlu0 0
        %667 = vperm.xlu0 %666, %v363
        %v668 = vpop.permute.xlu0 %667
        %671 = vset.pattern.permute.xlu0 0
        %672 = vperm.xlu0 %671, %v364
        %v673 = vpop.permute.xlu0 %672
        %676 = vset.pattern.permute.xlu0 0
        %677 = vperm.xlu0 %676, %v365
        %v678 = vpop.permute.xlu0 %677
        %681 = vset.pattern.permute.xlu0 0
        %682 = vperm.xlu0 %681, %v366
        %v683 = vpop.permute.xlu0 %682
        %686 = vset.pattern.permute.xlu0 0
        %687 = vperm.xlu0 %686, %v367
        %v688 = vpop.permute.xlu0 %687
        %v690 = vsub.f32 %v613, %v578
        %v691 = vsub.f32 %v613, %v579
        %v692 = vsub.f32 %v618, %v580
        %v693 = vsub.f32 %v618, %v581
        %v694 = vsub.f32 %v623, %v582
        %v695 = vsub.f32 %v623, %v583
        %v696 = vsub.f32 %v628, %v584
        %v697 = vsub.f32 %v628, %v585
        %v698 = vsub.f32 %v633, %v586
        %v699 = vsub.f32 %v633, %v587
        %v700 = vsub.f32 %v638, %v588
        %v701 = vsub.f32 %v638, %v589
        %v702 = vsub.f32 %v643, %v590
        %v703 = vsub.f32 %v643, %v591
        %v704 = vsub.f32 %v648, %v592
        %v705 = vsub.f32 %v648, %v593
        %v706 = vsub.f32 %v653, %v594
        %v707 = vsub.f32 %v653, %v595
        %v708 = vsub.f32 %v658, %v596
        %v709 = vsub.f32 %v658, %v597
        %v710 = vsub.f32 %v663, %v598
        %v711 = vsub.f32 %v663, %v599
        %v712 = vsub.f32 %v668, %v600
        %v713 = vsub.f32 %v668, %v601
        %v714 = vsub.f32 %v673, %v602
        %v715 = vsub.f32 %v673, %v603
        %v716 = vsub.f32 %v678, %v604
        %v717 = vsub.f32 %v678, %v605
        %v718 = vsub.f32 %v683, %v606
        %v719 = vsub.f32 %v683, %v607
        %v720 = vsub.f32 %v688, %v608
        %v721 = vsub.f32 %v688, %v609
        %v722 = vlaneseq
        %v723 = vshrl.u32 %v722, 7
        %v724 = vadd.s32 %v723, 8
        %v725 = vadd.s32 %v723, 16
        %v726 = vadd.s32 %v723, 24
        %v727 = vadd.s32 %v723, 32
        %v728 = vadd.s32 %v723, 40
        %v729 = vadd.s32 %v723, 48
        %v730 = vadd.s32 %v723, 56
        %v731 = vadd.s32 %v723, 64
        %v732 = vadd.s32 %v723, 72
        %v733 = vadd.s32 %v723, 80
        %v734 = vadd.s32 %v723, 88
        %v735 = vadd.s32 %v723, 96
        %v736 = vadd.s32 %v723, 104
        %v737 = vadd.s32 %v723, 112
        %v738 = vadd.s32 %v723, 120
        %v739 = vmin.f32 %v690, %v694
        %v740 = vmin.f32 %v692, %v696
        %v741 = vmin.f32 %v739, %v698
        %v742 = vmin.f32 %v740, %v700
        %v743 = vmin.f32 %v741, %v702
        %v744 = vmin.f32 %v742, %v704
        %v745 = vmin.f32 %v743, %v706
        %v746 = vmin.f32 %v744, %v708
        %v747 = vmin.f32 %v745, %v710
        %v748 = vmin.f32 %v746, %v712
        %v749 = vmin.f32 %v747, %v714
        %v750 = vmin.f32 %v748, %v716
        %v751 = vmin.f32 %v749, %v718
        %v752 = vmin.f32 %v750, %v720
        %v753 = vmin.f32 %v751, %v752
        %v754 = vrot.slane %v753, 4
        %v755 = vmin.f32 %v753, %v754
        %v756 = vrot.slane %v755, 2
        %v757 = vmin.f32 %v755, %v756
        %v758 = vrot.slane %v757, 1
        %v759 = vmin.f32 %v757, %v758
        %v760 = vmin.f32 %v691, %v695
        %v761 = vmin.f32 %v693, %v697
        %v762 = vmin.f32 %v760, %v699
        %v763 = vmin.f32 %v761, %v701
        %v764 = vmin.f32 %v762, %v703
        %v765 = vmin.f32 %v763, %v705
        %v766 = vmin.f32 %v764, %v707
        %v767 = vmin.f32 %v765, %v709
        %v768 = vmin.f32 %v766, %v711
        %v769 = vmin.f32 %v767, %v713
        %v770 = vmin.f32 %v768, %v715
        %v771 = vmin.f32 %v769, %v717
        %v772 = vmin.f32 %v770, %v719
        %v773 = vmin.f32 %v771, %v721
        %v774 = vmin.f32 %v772, %v773
        %v775 = vrot.slane %v774, 4
        %v776 = vmin.f32 %v774, %v775
        %v777 = vrot.slane %v776, 2
        %v778 = vmin.f32 %v776, %v777
        %v779 = vrot.slane %v778, 1
        %v780 = vmin.f32 %v778, %v779
        %vm781 = vcmp.eq.f32.partialorder %v690, %v759
        %vm782 = vcmp.eq.f32.partialorder %v691, %v780
        %vm783 = vcmp.eq.f32.partialorder %v692, %v759
        %vm784 = vcmp.eq.f32.partialorder %v693, %v780
        %vm785 = vcmp.eq.f32.partialorder %v694, %v759
        %vm786 = vcmp.eq.f32.partialorder %v695, %v780
        %vm787 = vcmp.eq.f32.partialorder %v696, %v759
        %vm788 = vcmp.eq.f32.partialorder %v697, %v780
        %vm789 = vcmp.eq.f32.partialorder %v698, %v759
        %vm790 = vcmp.eq.f32.partialorder %v699, %v780
        %vm791 = vcmp.eq.f32.partialorder %v700, %v759
        %vm792 = vcmp.eq.f32.partialorder %v701, %v780
        %vm793 = vcmp.eq.f32.partialorder %v702, %v759
        %vm794 = vcmp.eq.f32.partialorder %v703, %v780
        %vm795 = vcmp.eq.f32.partialorder %v704, %v759
        %vm796 = vcmp.eq.f32.partialorder %v705, %v780
        %vm797 = vcmp.eq.f32.partialorder %v706, %v759
        %vm798 = vcmp.eq.f32.partialorder %v707, %v780
        %vm799 = vcmp.eq.f32.partialorder %v708, %v759
        %vm800 = vcmp.eq.f32.partialorder %v709, %v780
        %vm801 = vcmp.eq.f32.partialorder %v710, %v759
        %vm802 = vcmp.eq.f32.partialorder %v711, %v780
        %vm803 = vcmp.eq.f32.partialorder %v712, %v759
        %vm804 = vcmp.eq.f32.partialorder %v713, %v780
        %vm805 = vcmp.eq.f32.partialorder %v714, %v759
        %vm806 = vcmp.eq.f32.partialorder %v715, %v780
        %vm807 = vcmp.eq.f32.partialorder %v716, %v759
        %vm808 = vcmp.eq.f32.partialorder %v717, %v780
        %vm809 = vcmp.eq.f32.partialorder %v718, %v759
        %vm810 = vcmp.eq.f32.partialorder %v719, %v780
        %vm811 = vcmp.eq.f32.partialorder %v720, %v759
        %vm812 = vcmp.eq.f32.partialorder %v721, %v780
        %v813 = vsel %vm781, %v723, 128
        %v814 = vsel %vm782, %v723, 128
        %v815 = vsel %vm783, %v724, 128
        %v816 = vsel %vm784, %v724, 128
        %v817 = vsel %vm785, %v725, 128
        %v818 = vsel %vm786, %v725, 128
        %v819 = vsel %vm787, %v726, 128
        %v820 = vsel %vm788, %v726, 128
        %v821 = vsel %vm789, %v727, 128
        %v822 = vsel %vm790, %v727, 128
        %v823 = vsel %vm791, %v728, 128
        %v824 = vsel %vm792, %v728, 128
        %v825 = vsel %vm793, %v729, 128
        %v826 = vsel %vm794, %v729, 128
        %v827 = vsel %vm795, %v730, 128
        %v828 = vsel %vm796, %v730, 128
        %v829 = vsel %vm797, %v731, 128
        %v830 = vsel %vm798, %v731, 128
        %v831 = vsel %vm799, %v732, 128
        %v832 = vsel %vm800, %v732, 128
        %v833 = vsel %vm801, %v733, 128
        %v834 = vsel %vm802, %v733, 128
        %v835 = vsel %vm803, %v734, 128
        %v836 = vsel %vm804, %v734, 128
        %v837 = vsel %vm805, %v735, 128
        %v838 = vsel %vm806, %v735, 128
        %v839 = vsel %vm807, %v736, 128
        %v840 = vsel %vm808, %v736, 128
        %v841 = vsel %vm809, %v737, 128
        %v842 = vsel %vm810, %v737, 128
        %v843 = vsel %vm811, %v738, 128
        %v844 = vsel %vm812, %v738, 128
        %vm845 = vcmp.lt.s32.totalorder %v813, %v817
        %v846 = vsel %vm845, %v813, %v817
        %vm847 = vcmp.lt.s32.totalorder %v815, %v819
        %v848 = vsel %vm847, %v815, %v819
        %vm849 = vcmp.lt.s32.totalorder %v846, %v821
        %v850 = vsel %vm849, %v846, %v821
        %vm851 = vcmp.lt.s32.totalorder %v848, %v823
        %v852 = vsel %vm851, %v848, %v823
        %vm853 = vcmp.lt.s32.totalorder %v850, %v825
        %v854 = vsel %vm853, %v850, %v825
        %vm855 = vcmp.lt.s32.totalorder %v852, %v827
        %v856 = vsel %vm855, %v852, %v827
        %vm857 = vcmp.lt.s32.totalorder %v854, %v829
        %v858 = vsel %vm857, %v854, %v829
        %vm859 = vcmp.lt.s32.totalorder %v856, %v831
        %v860 = vsel %vm859, %v856, %v831
        %vm861 = vcmp.lt.s32.totalorder %v858, %v833
        %v862 = vsel %vm861, %v858, %v833
        %vm863 = vcmp.lt.s32.totalorder %v860, %v835
        %v864 = vsel %vm863, %v860, %v835
        %vm865 = vcmp.lt.s32.totalorder %v862, %v837
        %v866 = vsel %vm865, %v862, %v837
        %vm867 = vcmp.lt.s32.totalorder %v864, %v839
        %v868 = vsel %vm867, %v864, %v839
        %vm869 = vcmp.lt.s32.totalorder %v866, %v841
        %v870 = vsel %vm869, %v866, %v841
        %vm871 = vcmp.lt.s32.totalorder %v868, %v843
        %v872 = vsel %vm871, %v868, %v843
        %vm873 = vcmp.lt.s32.totalorder %v870, %v872
        %v874 = vsel %vm873, %v870, %v872
        %v875 = vrot.slane %v874, 4
        %vm876 = vcmp.lt.s32.totalorder %v874, %v875
        %v877 = vsel %vm876, %v874, %v875
        %v878 = vrot.slane %v877, 2
        %vm879 = vcmp.lt.s32.totalorder %v877, %v878
        %v880 = vsel %vm879, %v877, %v878
        %v881 = vrot.slane %v880, 1
        %vm882 = vcmp.lt.s32.totalorder %v880, %v881
        %v883 = vsel %vm882, %v880, %v881
        %vm884 = vcmp.lt.s32.totalorder %v814, %v818
        %v885 = vsel %vm884, %v814, %v818
        %vm886 = vcmp.lt.s32.totalorder %v816, %v820
        %v887 = vsel %vm886, %v816, %v820
        %vm888 = vcmp.lt.s32.totalorder %v885, %v822
        %v889 = vsel %vm888, %v885, %v822
        %vm890 = vcmp.lt.s32.totalorder %v887, %v824
        %v891 = vsel %vm890, %v887, %v824
        %vm892 = vcmp.lt.s32.totalorder %v889, %v826
        %v893 = vsel %vm892, %v889, %v826
        %vm894 = vcmp.lt.s32.totalorder %v891, %v828
        %v895 = vsel %vm894, %v891, %v828
        %vm896 = vcmp.lt.s32.totalorder %v893, %v830
        %v897 = vsel %vm896, %v893, %v830
        %vm898 = vcmp.lt.s32.totalorder %v895, %v832
        %v899 = vsel %vm898, %v895, %v832
        %vm900 = vcmp.lt.s32.totalorder %v897, %v834
        %v901 = vsel %vm900, %v897, %v834
        %vm902 = vcmp.lt.s32.totalorder %v899, %v836
        %v903 = vsel %vm902, %v899, %v836
        %vm904 = vcmp.lt.s32.totalorder %v901, %v838
        %v905 = vsel %vm904, %v901, %v838
        %vm906 = vcmp.lt.s32.totalorder %v903, %v840
        %v907 = vsel %vm906, %v903, %v840
        %vm908 = vcmp.lt.s32.totalorder %v905, %v842
        %v909 = vsel %vm908, %v905, %v842
        %vm910 = vcmp.lt.s32.totalorder %v907, %v844
        %v911 = vsel %vm910, %v907, %v844
        %vm912 = vcmp.lt.s32.totalorder %v909, %v911
        %v913 = vsel %vm912, %v909, %v911
        %v914 = vrot.slane %v913, 4
        %vm915 = vcmp.lt.s32.totalorder %v913, %v914
        %v916 = vsel %vm915, %v913, %v914
        %v917 = vrot.slane %v916, 2
        %vm918 = vcmp.lt.s32.totalorder %v916, %v917
        %v919 = vsel %vm918, %v916, %v917
        %v920 = vrot.slane %v919, 1
        %vm921 = vcmp.lt.s32.totalorder %v919, %v920
        %v922 = vsel %vm921, %v919, %v920
        %vm923 = vcmp.eq.s32.totalorder %v723, %v883
        %vm924 = vcmp.eq.s32.totalorder %v723, %v922
        %vm925 = vcmp.eq.s32.totalorder %v724, %v883
        %vm926 = vcmp.eq.s32.totalorder %v724, %v922
        %vm927 = vcmp.eq.s32.totalorder %v725, %v883
        %vm928 = vcmp.eq.s32.totalorder %v725, %v922
        %vm929 = vcmp.eq.s32.totalorder %v726, %v883
        %vm930 = vcmp.eq.s32.totalorder %v726, %v922
        %vm931 = vcmp.eq.s32.totalorder %v727, %v883
        %vm932 = vcmp.eq.s32.totalorder %v727, %v922
        %vm933 = vcmp.eq.s32.totalorder %v728, %v883
        %vm934 = vcmp.eq.s32.totalorder %v728, %v922
        %vm935 = vcmp.eq.s32.totalorder %v729, %v883
        %vm936 = vcmp.eq.s32.totalorder %v729, %v922
        %vm937 = vcmp.eq.s32.totalorder %v730, %v883
        %vm938 = vcmp.eq.s32.totalorder %v730, %v922
        %vm939 = vcmp.eq.s32.totalorder %v731, %v883
        %vm940 = vcmp.eq.s32.totalorder %v731, %v922
        %vm941 = vcmp.eq.s32.totalorder %v732, %v883
        %vm942 = vcmp.eq.s32.totalorder %v732, %v922
        %vm943 = vcmp.eq.s32.totalorder %v733, %v883
        %vm944 = vcmp.eq.s32.totalorder %v733, %v922
        %vm945 = vcmp.eq.s32.totalorder %v734, %v883
        %vm946 = vcmp.eq.s32.totalorder %v734, %v922
        %vm947 = vcmp.eq.s32.totalorder %v735, %v883
        %vm948 = vcmp.eq.s32.totalorder %v735, %v922
        %vm949 = vcmp.eq.s32.totalorder %v736, %v883
        %vm950 = vcmp.eq.s32.totalorder %v736, %v922
        %vm951 = vcmp.eq.s32.totalorder %v737, %v883
        %vm952 = vcmp.eq.s32.totalorder %v737, %v922
        %vm953 = vcmp.eq.s32.totalorder %v738, %v883
        %vm954 = vcmp.eq.s32.totalorder %v738, %v922
        %v955 = vsel %vm923, 1, 0
        %v956 = vsel %vm924, 1, 0
        %v957 = vsel %vm925, 1, 0
        %v958 = vsel %vm926, 1, 0
        %v959 = vsel %vm927, 1, 0
        %v960 = vsel %vm928, 1, 0
        %v961 = vsel %vm929, 1, 0
        %v962 = vsel %vm930, 1, 0
        %v963 = vsel %vm931, 1, 0
        %v964 = vsel %vm932, 1, 0
        %v965 = vsel %vm933, 1, 0
        %v966 = vsel %vm934, 1, 0
        %v967 = vsel %vm935, 1, 0
        %v968 = vsel %vm936, 1, 0
        %v969 = vsel %vm937, 1, 0
        %v970 = vsel %vm938, 1, 0
        %v971 = vsel %vm939, 1, 0
        %v972 = vsel %vm940, 1, 0
        %v973 = vsel %vm941, 1, 0
        %v974 = vsel %vm942, 1, 0
        %v975 = vsel %vm943, 1, 0
        %v976 = vsel %vm944, 1, 0
        %v977 = vsel %vm945, 1, 0
        %v978 = vsel %vm946, 1, 0
        %v979 = vsel %vm947, 1, 0
        %v980 = vsel %vm948, 1, 0
        %v981 = vsel %vm949, 1, 0
        %v982 = vsel %vm950, 1, 0
        %v983 = vsel %vm951, 1, 0
        %v984 = vsel %vm952, 1, 0
        %v985 = vsel %vm953, 1, 0
        %v986 = vsel %vm954, 1, 0
        %v987 = vcvt.s32.f32 %v955
        %v988 = vcvt.s32.f32 %v956
        %v989 = vcvt.s32.f32 %v957
        %v990 = vcvt.s32.f32 %v958
        %v991 = vcvt.s32.f32 %v959
        %v992 = vcvt.s32.f32 %v960
        %v993 = vcvt.s32.f32 %v961
        %v994 = vcvt.s32.f32 %v962
        %v995 = vcvt.s32.f32 %v963
        %v996 = vcvt.s32.f32 %v964
        %v997 = vcvt.s32.f32 %v965
        %v998 = vcvt.s32.f32 %v966
        %v999 = vcvt.s32.f32 %v967
        %v1000 = vcvt.s32.f32 %v968
        %v1001 = vcvt.s32.f32 %v969
        %v1002 = vcvt.s32.f32 %v970
        %v1003 = vcvt.s32.f32 %v971
        %v1004 = vcvt.s32.f32 %v972
        %v1005 = vcvt.s32.f32 %v973
        %v1006 = vcvt.s32.f32 %v974
        %v1007 = vcvt.s32.f32 %v975
        %v1008 = vcvt.s32.f32 %v976
        %v1009 = vcvt.s32.f32 %v977
        %v1010 = vcvt.s32.f32 %v978
        %v1011 = vcvt.s32.f32 %v979
        %v1012 = vcvt.s32.f32 %v980
        %v1013 = vcvt.s32.f32 %v981
        %v1014 = vcvt.s32.f32 %v982
        %v1015 = vcvt.s32.f32 %v983
        %v1016 = vcvt.s32.f32 %v984
        %v1017 = vcvt.s32.f32 %v985
        %v1018 = vcvt.s32.f32 %v986
        %1019 = vmatprep.subr.mxu0 %v988
        %1020 = vmatpush1.msra.mxu0 %v987
        %1021 = vmatprep.subr.mxu0 %v990
        %1022 = vmatpush1.msra.mxu0 %v989
        %1023 = vmatprep.subr.mxu0 %v992
        %1024 = vmatpush1.msra.mxu0 %v991
        %1025 = vmatprep.subr.mxu0 %v994
        %1026 = vmatpush1.msra.mxu0 %v993
        %1027 = vmatprep.subr.mxu0 %v996
        %1028 = vmatpush1.msra.mxu0 %v995
        %1029 = vmatprep.subr.mxu0 %v998
        %1030 = vmatpush1.msra.mxu0 %v997
        %1031 = vmatprep.subr.mxu0 %v1000
        %1032 = vmatpush1.msra.mxu0 %v999
        %1033 = vmatprep.subr.mxu0 %v1002
        %1034 = vmatpush1.msra.mxu0 %v1001
        %1035 = vmatprep.subr.mxu0 %v1004
        %1036 = vmatpush1.msra.mxu0 %v1003
        %1037 = vmatprep.subr.mxu0 %v1006
        %1038 = vmatpush1.msra.mxu0 %v1005
        %1039 = vmatprep.subr.mxu0 %v1008
        %1040 = vmatpush1.msra.mxu0 %v1007
        %1041 = vmatprep.subr.mxu0 %v1010
        %1042 = vmatpush1.msra.mxu0 %v1009
        %1043 = vmatprep.subr.mxu0 %v1012
        %1044 = vmatpush1.msra.mxu0 %v1011
        %1045 = vmatprep.subr.mxu0 %v1014
        %1046 = vmatpush1.msra.mxu0 %v1013
        %1047 = vmatprep.subr.mxu0 %v1016
        %1048 = vmatpush1.msra.mxu0 %v1015
        %1049 = vmatprep.subr.mxu0 %v1018
        %1050 = vmatpush1.msra.mxu0 %v1017
        %1051 = vmatprep.subr.mxu0 0.0
        %1052 = vmatpush1.msra.mxu0 0.0
        %1053 = vmatprep.subr.mxu0 0.0
        %1054 = vmatpush1.msra.mxu0 0.0
        %1055 = vmatprep.subr.mxu0 0.0
        %1056 = vmatpush1.msra.mxu0 0.0
        %1057 = vmatprep.subr.mxu0 0.0
        %1058 = vmatpush1.msra.mxu0 0.0
        %1059 = vmatprep.subr.mxu0 0.0
        %1060 = vmatpush1.msra.mxu0 0.0
        %1061 = vmatprep.subr.mxu0 0.0
        %1062 = vmatpush1.msra.mxu0 0.0
        %1063 = vmatprep.subr.mxu0 0.0
        %1064 = vmatpush1.msra.mxu0 0.0
        %1065 = vmatprep.subr.mxu0 0.0
        %1066 = vmatpush1.msra.mxu0 0.0
        %1067 = vmatprep.subr.mxu0 0.0
        %1068 = vmatpush1.msra.mxu0 0.0
        %1069 = vmatprep.subr.mxu0 0.0
        %1070 = vmatpush1.msra.mxu0 0.0
        %1071 = vmatprep.subr.mxu0 0.0
        %1072 = vmatpush1.msra.mxu0 0.0
        %1073 = vmatprep.subr.mxu0 0.0
        %1074 = vmatpush1.msra.mxu0 0.0
        %1075 = vmatprep.subr.mxu0 0.0
        %1076 = vmatpush1.msra.mxu0 0.0
        %1077 = vmatprep.subr.mxu0 0.0
        %1078 = vmatpush1.msra.mxu0 0.0
        %1079 = vmatprep.subr.mxu0 0.0
        %1080 = vmatpush1.msra.mxu0 0.0
        %1081 = vmatprep.subr.mxu0 0.0
        %1082 = vmatpush1.msra.mxu0 0.0
        %1083 = vmatprep.mubr.f32.mxu0 0.0
        %1084 = vmatmul.mubr.f32.gmra.mrb[0].mxu0 %v348
        %v1085 = vpop.f32.mrb[0].mxu0
        %v1086 = vadd.f32 0.0, %v1085
        %v1087 = vpop.f32.mrb[0].mxu0
        %v1088 = vadd.f32 0.0, %v1087
        %1089 = vmatprep.mubr.f32.mxu0 0.0
        %1090 = vmatmul.mubr.f32.gmra.mrb[0].mxu0 %v349
        %v1091 = vpop.f32.mrb[0].mxu0
        %v1092 = vadd.f32 0.0, %v1091
        %v1093 = vpop.f32.mrb[0].mxu0
        %v1094 = vadd.f32 0.0, %v1093
        %1095 = vmatprep.mubr.f32.mxu0 0.0
        %1096 = vmatmul.mubr.f32.gmra.mrb[0].mxu0 %v350
        %v1097 = vpop.f32.mrb[0].mxu0
        %v1098 = vadd.f32 0.0, %v1097
        %v1099 = vpop.f32.mrb[0].mxu0
        %v1100 = vadd.f32 0.0, %v1099
        %1101 = vmatprep.mubr.f32.mxu0 0.0
        %1102 = vmatmul.mubr.f32.gmra.mrb[0].mxu0 %v351
        %v1103 = vpop.f32.mrb[0].mxu0
        %v1104 = vadd.f32 0.0, %v1103
        %v1105 = vpop.f32.mrb[0].mxu0
        %v1106 = vadd.f32 0.0, %v1105
        %1107 = vdwg.mxu0
        %1108 = vst [vmem:[%s314] sm:$0xff] %v1086
        %1109 = vst [vmem:[%s314 + $0x8] sm:$0xff] %v1088
        %1110 = vst [vmem:[%s314 + $0x10] sm:$0xff] %v1092
        %1111 = vst [vmem:[%s314 + $0x18] sm:$0xff] %v1094
        %1112 = vst [vmem:[%s314 + $0x20] sm:$0xff] %v1098
        %1113 = vst [vmem:[%s314 + $0x28] sm:$0xff] %v1100
        %1114 = vst [vmem:[%s314 + $0x30] sm:$0xff] %v1104
        %1115 = vst [vmem:[%s314 + $0x38] sm:$0xff] %v1106
        %v1116 = vcombine.low %v883, %v922
        %v1118 = vunpack.c.l.s4 1966171168
        %v1119 = vunpack.c.0.s8 %v1118
        %v1120 = vlaneseq
        %v1121 = vshrl.u32 %v1120, 7
        %v1122 = vsub.s32 %v1119, %v1121
        %v1123 = vrot.slane %v1116, %v1122
        %v1125 = vunpack.c.l.s4 1966171168
        %v1126 = vunpack.c.0.s8 %v1125
        %v1127 = vlaneseq
        %v1128 = vshrl.u32 %v1127, 7
        %v1129 = vsub.s32 %v1126, %v1128
        %v1130 = vrot.slane %v1123, %v1129
        %v1131 = vlaneseq
        %vm1132 = vcmp.ge.s32.totalorder %v1131, 0
        %vm1133 = vcmp.lt.s32.totalorder %v1131, 256
        %vm1134 = vmand %vm1132, %vm1133
        %1135 = vst.msk [vmem:[%s285] sm:$0x3] %vm1134, %v1130
        %v1136 = vsub.f32 %v1086, %v324
        %v1137 = vsub.f32 %v1088, %v325
        %v1138 = vsub.f32 %v1092, %v326
        %v1139 = vsub.f32 %v1094, %v327
        %v1140 = vsub.f32 %v1098, %v328
        %v1141 = vsub.f32 %v1100, %v329
        %v1142 = vsub.f32 %v1104, %v330
        %v1143 = vsub.f32 %v1106, %v331
        %v1144 = vmul.f32 %v1136, %v1136
        %v1145 = vmul.f32 %v1137, %v1137
        %v1146 = vmul.f32 %v1138, %v1138
        %v1147 = vmul.f32 %v1139, %v1139
        %v1148 = vmul.f32 %v1140, %v1140
        %v1149 = vmul.f32 %v1141, %v1141
        %v1150 = vmul.f32 %v1142, %v1142
        %v1151 = vmul.f32 %v1143, %v1143
        %v1152 = vadd.f32 %v1144, %v1146
        %v1153 = vadd.f32 %v1152, %v1148
        %v1154 = vadd.f32 %v1153, %v1150
        %v1155 = vrot.slane %v1154, 4
        %v1156 = vadd.f32 %v1154, %v1155
        %v1157 = vrot.slane %v1156, 2
        %v1158 = vadd.f32 %v1156, %v1157
        %v1159 = vrot.slane %v1158, 1
        %v1160 = vadd.f32 %v1158, %v1159
        %v1161 = vadd.f32 %v1145, %v1147
        %v1162 = vadd.f32 %v1161, %v1149
        %v1163 = vadd.f32 %v1162, %v1151
        %v1164 = vrot.slane %v1163, 4
        %v1165 = vadd.f32 %v1163, %v1164
        %v1166 = vrot.slane %v1165, 2
        %v1167 = vadd.f32 %v1165, %v1166
        %v1168 = vrot.slane %v1167, 1
        %v1169 = vadd.f32 %v1167, %v1168
        %v1172 = vcombine.low %v1160, %v1169
        %v1174 = vunpack.c.l.s4 1966171168
        %v1175 = vunpack.c.0.s8 %v1174
        %v1176 = vlaneseq
        %v1177 = vshrl.u32 %v1176, 7
        %v1178 = vsub.s32 %v1175, %v1177
        %v1179 = vrot.slane %v1172, %v1178
        %v1181 = vunpack.c.l.s4 1966171168
        %v1182 = vunpack.c.0.s8 %v1181
        %v1183 = vlaneseq
        %v1184 = vshrl.u32 %v1183, 7
        %v1185 = vsub.s32 %v1182, %v1184
        %v1186 = vrot.slane %v1179, %v1185
        %1188 = vst.msk [vmem:[%s323] sm:$0x3] %vm1134, %v1186
        %s1189 = smul.u32 2, %s26
        %p1190 = scmp.lt.s32.totalorder %s25, 1
        %s1191 = scalar_select %p1190, %s25, 1
        %p1192 = scmp.lt.s32.totalorder %s1189, 1
        %s1193 = scalar_select %p1192, %s1189, 1
        %s1194 = smul.addr %s1191, 8
        %s1195 = sadd.s32 %s1193, %s1194
        %s1196 = smul.addr %s1195, 8
        %s1197 = scalar_lea.vmem %s4, %s1196
        %s1198 = sand.u32 %s162, 1
        %s1199 = scalar_lea.sflag [#allocation3], %s1198
        %s1200 = sand.u32 %s162, 1
        %s1201 = smul.addr %s1200, 2
        %s1202 = scalar_lea.vmem [#allocation2], %s1201
        %p1203 = scmp.lt.s32.totalorder %s25, 1
        %s1204 = scalar_select %p1203, %s25, 1
        %p1205 = scmp.lt.s32.totalorder %s26, 0
        %s1206 = scalar_select %p1205, %s26, 0
        %s1207 = smul.addr %s1206, 2
        %s1208 = smul.addr %s1204, 2
        %s1209 = sadd.s32 %s1207, %s1208
        %s1210 = scalar_lea.vmem %s6, %s1209
        // Predicated region
        $region37: #{vector_quantizer2_forward.1} parent=35 // pred_check
          %p1211 = pneg %p144
        $region38: #{vector_quantizer2_forward.1} parent=35 // pred_check_branch
          %1213 = sbr.rel (%p1211) target = $region40
        $region39: #{vector_quantizer2_forward.1} parent=35 // pred_region
          %s1214 = smul.u32 2, %s26
        $region40: #{vector_quantizer2_forward.1} parent=35 // pred_fallthru
          _
        // Predicated region
        $region41: #{vector_quantizer2_forward.1} parent=35 // pred_check
          %p1215 = pneg %p172
        $region42: #{vector_quantizer2_forward.1} parent=35 // pred_check_branch
          %1217 = sbr.rel (%p1215) target = $region44
        $region43: #{vector_quantizer2_forward.1} parent=35 // pred_region
          %s1219 = ssub.s32 32, 32
          %1220 = vsyncadd %s1199, %s1219
          %s1221 = smul.addr %s26, 2
          %s1222 = smul.addr %s25, 2
          %s1223 = sadd.s32 %s1221, %s1222
          %s1224 = smul.addr %s1223, 16
          %s1225 = scalar_lea.hbm %s5, %s1224
          %s1227 = sshll.u32 %s1202, 4
          %s1228 = int_to_ptr.vmem [resolvable:$true] %s1227
          %1230 = dma.vmem_to_hbm [thread:$0]  %s1228, 32, %s1225, %s1199
        $region44: #{vector_quantizer2_forward.1} parent=35 // pred_fallthru
          _
        // Predicated region
        $region45: #{vector_quantizer2_forward.1} parent=35 // pred_check
          %p1231 = pneg %p200
        $region46: #{vector_quantizer2_forward.1} parent=35 // pred_check_branch
          %1233 = sbr.rel (%p1231) target = $region48
        $region47: #{vector_quantizer2_forward.1} parent=35 // pred_region
          _
        $region48: #{vector_quantizer2_forward.1} parent=35 // pred_fallthru
          _
      $region36: #{vector_quantizer2_forward.1} parent=5 // pred_fallthru
        _
      %p1234 = scmp.le.s32.totalorder 2, %s16
      // Predicated region
      $region49: #{vector_quantizer2_forward.1} parent=5 // pred_check
        %p1235 = pneg %p1234
      $region50: #{vector_quantizer2_forward.1} parent=5 // pred_check_branch
        %1237 = sbr.rel (%p1235) target = $region52
      $region51: #{vector_quantizer2_forward.1} parent=5 // pred_region
        %s1238 = ssub.s32 %s16, 2
        // Predicated region
        $region53: #{vector_quantizer2_forward.1} parent=51 // pred_check
          %p1239 = pneg %p150
        $region54: #{vector_quantizer2_forward.1} parent=51 // pred_check_branch
          %1241 = sbr.rel (%p1239) target = $region56
        $region55: #{vector_quantizer2_forward.1} parent=51 // pred_region
          %s1242 = smul.u32 2, %s28
          %p1243 = scmp.lt.s32.totalorder %s27, 1
          %s1244 = scalar_select %p1243, %s27, 1
          %p1245 = scmp.lt.s32.totalorder %s1242, 1
          %s1246 = scalar_select %p1245, %s1242, 1
          %s1247 = smul.addr %s1244, 8
          %s1248 = sadd.s32 %s1246, %s1247
          %s1249 = smul.addr %s1248, 8
          %s1250 = scalar_lea.vmem %s4, %s1249
        $region56: #{vector_quantizer2_forward.1} parent=51 // pred_fallthru
          _
        // Predicated region
        $region57: #{vector_quantizer2_forward.1} parent=51 // pred_check
          %p1251 = pneg %p178
        $region58: #{vector_quantizer2_forward.1} parent=51 // pred_check_branch
          %1253 = sbr.rel (%p1251) target = $region60
        $region59: #{vector_quantizer2_forward.1} parent=51 // pred_region
          %s1254 = sand.u32 %s163, 1
          %s1255 = scalar_lea.sflag [#allocation3], %s1254
          %s1256 = sand.u32 %s163, 1
          %s1257 = smul.addr %s1256, 2
          %s1258 = scalar_lea.vmem [#allocation2], %s1257
          %1259 = dma.done %s1255, 32
        $region60: #{vector_quantizer2_forward.1} parent=51 // pred_fallthru
          _
        // Predicated region
        $region61: #{vector_quantizer2_forward.1} parent=51 // pred_check
          %p1260 = pneg %p206
        $region62: #{vector_quantizer2_forward.1} parent=51 // pred_check_branch
          %1262 = sbr.rel (%p1260) target = $region64
        $region63: #{vector_quantizer2_forward.1} parent=51 // pred_region
          %p1263 = scmp.lt.s32.totalorder %s27, 1
          %s1264 = scalar_select %p1263, %s27, 1
          %p1265 = scmp.lt.s32.totalorder %s28, 0
          %s1266 = scalar_select %p1265, %s28, 0
          %s1267 = smul.addr %s1266, 2
          %s1268 = smul.addr %s1264, 2
          %s1269 = sadd.s32 %s1267, %s1268
          %s1270 = scalar_lea.vmem %s6, %s1269
        $region64: #{vector_quantizer2_forward.1} parent=51 // pred_fallthru
          _
      $region52: #{vector_quantizer2_forward.1} parent=5 // pred_fallthru
        _
    $region6: #{vector_quantizer2_forward.1} parent=1 // loop_footer
      %s20 = sadd.s32 1, %s16
    $region7: #{vector_quantizer2_forward.1} parent=1 // loop_footer_branch
      %15 = sbr.rel target = $region3
    $region8: #{vector_quantizer2_forward.1} parent=1 // loop_exit
      _
    %1271 = vsyncpa [#allocation3], 1
    %s1272 = scalar_lea.sflag [#allocation3], 1
    %1273 = vsyncpa %s1272, 1

</llo_original>
